<compile_context>
chip_gen: v7x
topology: tpu7x:2x2x1
jax: 0.10.0
libtpu: 0.0.40
codegen_flags: <defaults>
</compile_context>

<pallas_src>
import math

import jax
import jax.numpy as jnp
from jax.experimental import pallas as pl
from jax.experimental.pallas import tpu as pltpu


def _copy_kernel(x_ref, o_ref):
    # (tb, L) -> (tb, L) identity copy; lane-dense, unmasked stores.
    o_ref[...] = x_ref[...]


_LANE = 128
_TARGET_TILE_BYTES = 2 * 1024 * 1024  # safe under v5e's 16 MiB scoped-VMEM default


def _sublane_multiple(dtype):
    # Sublane row multiple so packed sub-32-bit rows never straddle blocks.
    itemsize = jnp.dtype(dtype).itemsize
    return {4: 8, 2: 16, 1: 32}.get(itemsize, 8)


def _pick_lane_width(n_elems):
    # Largest "nice" multiple of 128 that divides the element count.
    if n_elems % _LANE != 0:
        return None
    for cand in (4096, 2048, 1024, 512, 256, 128):
        if n_elems % cand == 0:
            return cand
    return _LANE


def pallas_reshape(x, channels, rows, cols):
    """x: (B, ...) with prod(...) == channels*rows*cols
       -> (B, channels, rows, cols)"""
    batch = x.shape[0]
    out_shape = (batch, channels, rows, cols)
    n_elems = math.prod(x.shape)
    assert n_elems == batch * channels * rows * cols, (
        f"input has {n_elems} elements, expected "
        f"{batch * channels * rows * cols}")

    lane = _pick_lane_width(n_elems)
    if lane is None:
        # Cannot form lane-dense tiles; don't emit masked vst.msk partial
        # stores — the contiguous reshape is metadata-only anyway.
        return jnp.reshape(x, out_shape)

    dtype = x.dtype
    itemsize = jnp.dtype(dtype).itemsize
    sub = _sublane_multiple(dtype)
    n_rows = n_elems // lane

    # Tile rows: ~2 MiB tiles, sublane-aligned.
    tb = max(1, _TARGET_TILE_BYTES // (lane * itemsize))
    tb = max(sub, (tb // sub) * sub)
    if tb >= n_rows:
        total_bytes = n_elems * itemsize
        if n_rows >= 2 * sub and total_bytes >= _TARGET_TILE_BYTES:
            # Sizeable single-tile array: split into >=2 parallel grid steps
            # so both v7x TensorCores issue DMA (no-op cost on v5e/v6e).
            tb = min(n_rows, sub * math.ceil(math.ceil(n_rows / 2) / sub))
        else:
            tb = n_rows  # tiny array: one full block (full-dim rule applies)

    grid = (pl.cdiv(n_rows, tb),)
    tile_bytes = tb * lane * itemsize
    # 2 double-buffered tiles each for input and output, plus headroom.
    vmem_limit = min(64 * 1024 * 1024,
                     max(4 * tile_bytes + (1 << 20), 8 * 1024 * 1024))

    # Metadata-only flatten for contiguous input.
    x2d = jnp.reshape(x, (n_rows, lane))

    out2d = pl.pallas_call(
        _copy_kernel,
        out_shape=jax.ShapeDtypeStruct((n_rows, lane), dtype),
        grid=grid,
        in_specs=[pl.BlockSpec((tb, lane), lambda b: (b, 0))],
        out_specs=pl.BlockSpec((tb, lane), lambda b: (b, 0)),
        input_output_aliases={0: 0},  # identity copy: reuse input HBM alloc
        compiler_params=pltpu.CompilerParams(
            dimension_semantics=("parallel",),
            vmem_limit_bytes=vmem_limit),
    )(x2d)

    # The actual "reshape" of the module: metadata-only, outside the kernel.
    return jnp.reshape(out2d, out_shape)


if __name__ == "__main__":
    # Module config: Reshape(channels=4, rows=16, cols=16)
    channels, rows, cols = 4, 16, 16
    batch = 2

    key = jax.random.PRNGKey(0)
    x = jax.random.normal(key, (batch, channels * rows * cols),
                          dtype=jnp.float32)

    # Reference: PyTorch .view on contiguous input == row-major reshape.
    ref = jnp.reshape(x, (batch, channels, rows, cols))

    reshape_fn = jax.jit(lambda v: pallas_reshape(v, channels, rows, cols))
    out = jax.block_until_ready(reshape_fn(x))

    assert out.shape == (batch, channels, rows, cols), out.shape
    assert out.dtype == x.dtype
    assert jnp.array_equal(out, ref), "mismatch vs reference reshape"

    print("KERNEL_OK")
</pallas_src>

<mosaic_0001>
module attributes {stable_mosaic.version = 11 : i64} {
  func.func @_copy_kernel(%arg0: i32, %arg1: memref<1x2048xf32, #tpu.memory_space<vmem>>, %arg2: memref<1x2048xf32, #tpu.memory_space<vmem>>) attributes {dimension_semantics = [#tpu.dimension_semantics<parallel>], iteration_bounds = array<i64: 1>, scalar_prefetch = 0 : i64, scratch_operands = 0 : i64, tpu.core_type = #tpu.core_type<tc>, window_params = [{transform_indices = @transform_0, window_bounds = array<i64: 1, 2048>}, {transform_indices = @transform_1, window_bounds = array<i64: 1, 2048>}]} {
    %c0 = arith.constant 0 : index
    %c0_0 = arith.constant 0 : index
    %0 = vector.load %arg1[%c0, %c0_0] : memref<1x2048xf32, #tpu.memory_space<vmem>>, vector<1x2048xf32>
    %c0_1 = arith.constant 0 : index
    %c0_2 = arith.constant 0 : index
    %1 = vector.load %arg2[%c0_1, %c0_2] : memref<1x2048xf32, #tpu.memory_space<vmem>>, vector<1x2048xf32>
    tpu.vector_store %arg2[%c0_1, %c0_2], %0 {strides = array<i32>} : memref<1x2048xf32, #tpu.memory_space<vmem>>, vector<1x2048xf32>,
    return
  }
  func.func @transform_0(%arg0: i32) -> (i32, i32) {
    %c0_i32 = arith.constant 0 : i32
    %c0_i32_0 = arith.constant 0 : i32
    return %arg0, %c0_i32 : i32, i32
  }
  func.func @transform_1(%arg0: i32) -> (i32, i32) {
    %c0_i32 = arith.constant 0 : i32
    %c0_i32_0 = arith.constant 0 : i32
    return %arg0, %c0_i32 : i32, i32
  }
}

</mosaic_0001>

<llo_original>
// kernel: _lambda_.1
$region0: #{_lambda_.1}
  #allocation0 [shape = 'u32[]', space=smem, size = 0x4, offset = 0x4, fixed_abs, tag = 'smem constant byte address 0x4 - core index']
  #allocation1 [shape = 'u32[144,128]{1,0:T(1,128)}', space=vmem, size = 0x12000, scoped, tag = 'internal scratch']
  %s0 = inlined_call_operand.vmem [shape: f32[1,2048], index: 0, kind: input, shape index: {}, may-alias: {0,1}]
  %s1 = inlined_call_operand.vmem [shape: f32[1,2048], index: 1, kind: output, shape index: {}, may-alias: {0,1}]
  %s2 = sld [smem:[#allocation0]]
  $region14: #{_lambda_.1} parent=0
    _
  %s4 = ssub.s32 1, %s2
  %s5 = scalar_select 0, %s4, %s2
  // Predicated region
  $region2: #{_lambda_.1} parent=0 // pred_check
    _
  $region3: #{_lambda_.1} parent=0 // pred_check_branch
    %7 = sbr.rel (0) target = $region5
  $region4: #{_lambda_.1} parent=0 // pred_region
    _
  $region5: #{_lambda_.1} parent=0 // pred_fallthru
    _
  %v8 = vld [vmem:[%s0] sm:$0xff]
  %v9 = vld [vmem:[%s0 + $0x8] sm:$0xff]
  %10 = vst [vmem:[%s1] sm:$0xff] %v8
  %11 = vst [vmem:[%s1 + $0x8] sm:$0xff] %v9
  // Predicated region
  $region6: #{_lambda_.1} parent=0 // pred_check
    _
  $region7: #{_lambda_.1} parent=0 // pred_check_branch
    %13 = sbr.rel (0) target = $region9
  $region8: #{_lambda_.1} parent=0 // pred_region
    _
  $region9: #{_lambda_.1} parent=0 // pred_fallthru
    _
  // Predicated region
  $region10: #{_lambda_.1} parent=0 // pred_check
    _
  $region11: #{_lambda_.1} parent=0 // pred_check_branch
    %15 = sbr.rel (0) target = $region13
  $region12: #{_lambda_.1} parent=0 // pred_region
    _
  $region13: #{_lambda_.1} parent=0 // pred_fallthru
    _

</llo_original>
